<compile_context>
chip_gen: v6e
topology: v6e:2x2x1
jax: 0.10.0
libtpu: 0.0.40
codegen_flags: <defaults>
</compile_context>

<pallas_src>
import functools
import math

import jax
import jax.numpy as jnp
from jax.experimental import pallas as pl
from jax.experimental.pallas import tpu as pltpu


def _patch_embed_kernel(x_ref, w_ref, b_ref, o_ref):
    # x_ref: (TILE_B, F), w_ref: (F, P*E), b_ref: (1, P*E), o_ref: (TILE_B, P*E)
    acc = jnp.dot(x_ref[...], w_ref[...], preferred_element_type=jnp.float32)
    o_ref[...] = (acc + b_ref[...]).astype(o_ref.dtype)


def _choose_tile_b(batch):
    # Block sublane dim must be a multiple of 8 OR equal the full array dim.
    # Small batch -> one full-dim tile; large batch -> 512-row tiles (multiple
    # of 8, amortizes the ~0.35 us per-step overhead, and stays tiny next to
    # even v7x's 64 MiB VMEM: 512*(60+256)*4B*2buf ~ 1.3 MiB).
    return batch if batch <= 512 else 512


@functools.partial(jax.jit, static_argnames=("num_patches", "embed_dim"))
def patch_embeddings_forward(x, w_bd, b_tiled, *, num_patches, embed_dim):
    """x: (B, feature_size) f32; w_bd: (F, P*E); b_tiled: (1, P*E)."""
    B, F = x.shape
    N = num_patches * embed_dim
    tile_b = _choose_tile_b(B)
    grid_m = pl.cdiv(B, tile_b)

    out2d = pl.pallas_call(
        _patch_embed_kernel,
        out_shape=jax.ShapeDtypeStruct((B, N), x.dtype),
        grid_spec=pl.GridSpec(
            grid=(grid_m,),
            in_specs=[
                pl.BlockSpec((tile_b, F), lambda i: (i, 0)),   # x tile per step
                pl.BlockSpec((F, N), lambda i: (0, 0)),        # weight resident
                pl.BlockSpec((1, N), lambda i: (0, 0)),        # bias resident
            ],
            out_specs=pl.BlockSpec((tile_b, N), lambda i: (i, 0)),
        ),
        compiler_params=pltpu.CompilerParams(
            dimension_semantics=("parallel",),      # megacore-shardable on v7x
            vmem_limit_bytes=64 * 1024 * 1024,      # headroom for large TILE_B
        ),
    )(x, w_bd, b_tiled)

    return out2d.reshape(B, num_patches, embed_dim)


class PatchEmbeddingsPallas:
    """Mirror of the PyTorch module; deterministic nn.Linear-style init."""

    def __init__(self, feature_size, num_patches, embed_dim, dropout=0.25, key=None):
        self.feature_size = feature_size
        self.num_patches = num_patches
        self.patch_size = math.ceil(feature_size / num_patches)
        self.pad_size = num_patches * self.patch_size - feature_size
        self.embed_dim = embed_dim
        # TODO(synk): `dropout` arg is unused in the reference forward(); nothing to port.

        if key is None:
            key = jax.random.PRNGKey(42)
        kw, kb = jax.random.split(key)
        bound = 1.0 / math.sqrt(self.patch_size)  # torch.nn.Linear default init bound
        self.weight = jax.random.uniform(
            kw, (embed_dim, self.patch_size), jnp.float32, -bound, bound
        )
        self.bias = jax.random.uniform(kb, (embed_dim,), jnp.float32, -bound, bound)

        # ---- hoisted, one-time layout prep (review items: block-diag weight,
        # lane-dense output, no per-call transpose/reshape) -----------------
        P, S, E, F = num_patches, self.patch_size, embed_dim, feature_size
        w_t = self.weight.T                                   # (S, E)
        w_full = jnp.zeros((P * S, P * E), jnp.float32)
        for p in range(P):                                    # static loop at init
            w_full = w_full.at[p * S:(p + 1) * S, p * E:(p + 1) * E].set(w_t)
        # Drop the rows that would have multiplied the zero-pad columns.
        self.w_bd = w_full[:F]                                # (F, P*E)
        self.b_tiled = jnp.tile(self.bias, P).reshape(1, P * E)

    def __call__(self, x):
        return patch_embeddings_forward(
            x,
            self.w_bd,
            self.b_tiled,
            num_patches=self.num_patches,
            embed_dim=self.embed_dim,
        )


if __name__ == "__main__":
    # Small shapes consistent with the module:
    #   feature_size=60, num_patches=8 -> patch_size=8, pad_size=4; embed_dim=32
    B, feature_size, num_patches, embed_dim = 2, 60, 8, 32

    x = jax.random.normal(jax.random.PRNGKey(0), (B, feature_size), dtype=jnp.float32)

    module = PatchEmbeddingsPallas(
        feature_size, num_patches, embed_dim, key=jax.random.PRNGKey(1)
    )
    out = module(x)
    out = jax.block_until_ready(out)

    # Pure-JAX reference of the original (pad -> view -> Linear) math, using
    # the un-transformed weight/bias, to validate the block-diagonal rewrite.
    x_ref = jnp.pad(x, ((0, 0), (0, module.pad_size))).reshape(
        B, num_patches, module.patch_size
    )
    ref = jnp.einsum("bps,es->bpe", x_ref, module.weight) + module.bias

    assert out.shape == (B, num_patches, embed_dim)
    assert jnp.allclose(out, ref, atol=1e-5, rtol=1e-5)

    print("KERNEL_OK")
</pallas_src>

<mosaic_0001>
module attributes {stable_mosaic.version = 11 : i64} {
  func.func @_patch_embed_kernel(%arg0: i32, %arg1: memref<2x60xf32, #tpu.memory_space<vmem>>, %arg2: memref<60x256xf32, #tpu.memory_space<vmem>>, %arg3: memref<1x256xf32, #tpu.memory_space<vmem>>, %arg4: memref<2x256xf32, #tpu.memory_space<vmem>>) attributes {dimension_semantics = [#tpu.dimension_semantics<parallel>], iteration_bounds = array<i64: 1>, scalar_prefetch = 0 : i64, scratch_operands = 0 : i64, tpu.core_type = #tpu.core_type<tc>, window_params = [{transform_indices = @transform_0, window_bounds = array<i64: 2, 60>}, {pipeline_mode = #tpu.pipeline_mode<synchronous>, transform_indices = @transform_1, window_bounds = array<i64: 60, 256>}, {pipeline_mode = #tpu.pipeline_mode<synchronous>, transform_indices = @transform_2, window_bounds = array<i64: 1, 256>}, {transform_indices = @transform_3, window_bounds = array<i64: 2, 256>}]} {
    %c0 = arith.constant 0 : index
    %c0_0 = arith.constant 0 : index
    %0 = vector.load %arg1[%c0, %c0_0] : memref<2x60xf32, #tpu.memory_space<vmem>>, vector<2x60xf32>
    %c0_1 = arith.constant 0 : index
    %c0_2 = arith.constant 0 : index
    %1 = vector.load %arg2[%c0_1, %c0_2] : memref<60x256xf32, #tpu.memory_space<vmem>>, vector<60x256xf32>
    %cst = arith.constant dense<0.000000e+00> : vector<2x256xf32>
    %2 = tpu.matmul %0, %1, %cst {dimension_numbers = #tpu.dot_dimension_numbers<[1], [0], [0], [1], [0, 0, 1, 1], [], []>} : vector<2x60xf32>, vector<60x256xf32>, vector<2x256xf32> -> vector<2x256xf32>
    %c0_3 = arith.constant 0 : index
    %c0_4 = arith.constant 0 : index
    %3 = vector.load %arg3[%c0_3, %c0_4] : memref<1x256xf32, #tpu.memory_space<vmem>>, vector<1x256xf32>
    %4 = vector.broadcast %3 : vector<1x256xf32> to vector<2x256xf32>
    %5 = arith.addf %2, %4 : vector<2x256xf32>
    %c0_5 = arith.constant 0 : index
    %c0_6 = arith.constant 0 : index
    %6 = vector.load %arg4[%c0_5, %c0_6] : memref<2x256xf32, #tpu.memory_space<vmem>>, vector<2x256xf32>
    tpu.vector_store %arg4[%c0_5, %c0_6], %5 {strides = array<i32>} : memref<2x256xf32, #tpu.memory_space<vmem>>, vector<2x256xf32>,
    return
  }
  func.func @transform_0(%arg0: i32) -> (i32, i32) {
    %c0_i32 = arith.constant 0 : i32
    %c0_i32_0 = arith.constant 0 : i32
    return %arg0, %c0_i32 : i32, i32
  }
  func.func @transform_1(%arg0: i32) -> (i32, i32) {
    %c0_i32 = arith.constant 0 : i32
    %c0_i32_0 = arith.constant 0 : i32
    %c0_i32_1 = arith.constant 0 : i32
    return %c0_i32, %c0_i32_0 : i32, i32
  }
  func.func @transform_2(%arg0: i32) -> (i32, i32) {
    %c0_i32 = arith.constant 0 : i32
    %c0_i32_0 = arith.constant 0 : i32
    %c0_i32_1 = arith.constant 0 : i32
    return %c0_i32, %c0_i32_0 : i32, i32
  }
  func.func @transform_3(%arg0: i32) -> (i32, i32) {
    %c0_i32 = arith.constant 0 : i32
    %c0_i32_0 = arith.constant 0 : i32
    return %arg0, %c0_i32 : i32, i32
  }
}

</mosaic_0001>

<llo_original>
// kernel: patch_embeddings_forward.1
$region0: #{patch_embeddings_forward.1}
  #allocation0 [shape = 'u32[]', space=smem, size = 0x4, offset = 0x4, fixed_abs, tag = 'smem constant byte address 0x4 - core index']
  #allocation1 [shape = 'u32[144,128]{1,0:T(1,128)}', space=vmem, size = 0x12000, scoped, tag = 'internal scratch']
  %s0 = inlined_call_operand.hbm [shape: f32[2,60], index: 0, kind: input, shape index: {}]
  %s1 = inlined_call_operand.hbm [shape: f32[60,256], index: 1, kind: input, shape index: {}]
  %s2 = inlined_call_operand.vmem [shape: f32[1,256], index: 2, kind: input, shape index: {}]
  %s3 = inlined_call_operand.vmem [shape: f32[2,256], index: 3, kind: output, shape index: {}]
  %s4 = sld [smem:[#allocation0]]
  $region30: #{patch_embeddings_forward.1} parent=0
    _
  %s6 = ssub.s32 1, %s4
  %s7 = scalar_select 0, %s6, %s4
  $region1: #{patch_embeddings_forward.1} parent=0
    #allocation2 [shape = 'u8[1024]{0}', space=vmem, size = 0x400, scoped, tag = 'input window, operand 0, single buffered']
    #allocation3 [shape = 's32[1]{0}', space=sflag, size = 0x4, scoped, tag = 'scoped memory for patch_embeddings_forward.1']
    #allocation4 [shape = 'u8[65536]{0}', space=vmem, size = 0x10000, scoped, tag = 'input window, operand 1, single buffered']
    #allocation5 [shape = 's32[1]{0}', space=sflag, size = 0x4, scoped, tag = 'scoped memory for patch_embeddings_forward.1']
    %8 = vsyncpa [#allocation3], 0
    %9 = vsyncpa [#allocation5], 0
    // Predicated region
    $region2: #{patch_embeddings_forward.1} parent=1 // pred_check
      _
    $region3: #{patch_embeddings_forward.1} parent=1 // pred_check_branch
      %11 = sbr.rel (0) target = $region5
    $region4: #{patch_embeddings_forward.1} parent=1 // pred_region
      %s13 = ssub.s32 32, 32
      %14 = vsyncadd [#allocation3], %s13
      %s16 = sshll.u32 [#allocation2], 4
      %s17 = int_to_ptr.vmem [resolvable:$true] %s16
      %19 = dma.hbm_to_vmem [thread:$0]  %s0, 32, %s17, [#allocation3]
    $region5: #{patch_embeddings_forward.1} parent=1 // pred_fallthru
      _
    // Predicated region
    $region6: #{patch_embeddings_forward.1} parent=1 // pred_check
      _
    $region7: #{patch_embeddings_forward.1} parent=1 // pred_check_branch
      %21 = sbr.rel (0) target = $region9
    $region8: #{patch_embeddings_forward.1} parent=1 // pred_region
      %s23 = ssub.s32 2048, 2048
      %24 = vsyncadd [#allocation5], %s23
      %s25 = sshll.u32 [#allocation4], 4
      %s26 = int_to_ptr.vmem [resolvable:$true] %s25
      %31 = dma.hbm_to_vmem [thread:$0]  %s1, 2048, %s26, [#allocation5], 256, 256, 16
    $region9: #{patch_embeddings_forward.1} parent=1 // pred_fallthru
      _
    // Predicated region
    $region10: #{patch_embeddings_forward.1} parent=1 // pred_check
      _
    $region11: #{patch_embeddings_forward.1} parent=1 // pred_check_branch
      %33 = sbr.rel (0) target = $region13
    $region12: #{patch_embeddings_forward.1} parent=1 // pred_region
      _
    $region13: #{patch_embeddings_forward.1} parent=1 // pred_fallthru
      _
    // Predicated region
    $region14: #{patch_embeddings_forward.1} parent=1 // pred_check
      _
    $region15: #{patch_embeddings_forward.1} parent=1 // pred_check_branch
      %35 = sbr.rel (0) target = $region17
    $region16: #{patch_embeddings_forward.1} parent=1 // pred_region
      %36 = dma.done [#allocation3], 32
    $region17: #{patch_embeddings_forward.1} parent=1 // pred_fallthru
      _
    // Predicated region
    $region18: #{patch_embeddings_forward.1} parent=1 // pred_check
      _
    $region19: #{patch_embeddings_forward.1} parent=1 // pred_check_branch
      %38 = sbr.rel (0) target = $region21
    $region20: #{patch_embeddings_forward.1} parent=1 // pred_region
      %39 = dma.done [#allocation5], 2048
    $region21: #{patch_embeddings_forward.1} parent=1 // pred_fallthru
      _
    %v40 = vld [vmem:[#allocation2] sm:$0x3]
    %v41 = vld [vmem:[#allocation4] sm:$0xff]
    %v42 = vld [vmem:[#allocation4 + $0x8] sm:$0xff]
    %v43 = vld [vmem:[#allocation4 + $0x10] sm:$0xff]
    %v44 = vld [vmem:[#allocation4 + $0x18] sm:$0xff]
    %v45 = vld [vmem:[#allocation4 + $0x20] sm:$0xff]
    %v46 = vld [vmem:[#allocation4 + $0x28] sm:$0xff]
    %v47 = vld [vmem:[#allocation4 + $0x30] sm:$0xff]
    %v48 = vld [vmem:[#allocation4 + $0x38] sm:$0xff]
    %v49 = vld [vmem:[#allocation4 + $0x40] sm:$0xff]
    %v50 = vld [vmem:[#allocation4 + $0x48] sm:$0xff]
    %v51 = vld [vmem:[#allocation4 + $0x50] sm:$0xff]
    %v52 = vld [vmem:[#allocation4 + $0x58] sm:$0xff]
    %v53 = vld [vmem:[#allocation4 + $0x60] sm:$0xff]
    %v54 = vld [vmem:[#allocation4 + $0x68] sm:$0xff]
    %v55 = vld [vmem:[#allocation4 + $0x70] sm:$0xf]
    %v56 = vld [vmem:[#allocation4 + $0x78] sm:$0xf]
    %v57 = vld [vmem:[%s2] sm:$0x3]
    %v59 = vlaneseq
    %v60 = vshrl.u32 %v59, 7
    %v61 = vsub.s32 0, %v60
    %v62 = vrot.slane %v57, %v61
    %v63 = vlaneseq
    %v64 = vshrl.u32 %v63, 7
    %v65 = vsub.s32 1, %v64
    %v66 = vrot.slane %v57, %v65
    %vm69 = vcmask 490496
    %v71 = vsel %vm69, %v40, 0
    %vm73 = vcmask 1043456
    %v75 = vsel %vm73, %v55, 0
    %v78 = vsel %vm73, %v56, 0
    %80 = vmatprep.subr.mxu0 0.0
    %81 = vmatpush1.msra.mxu0 0.0
    %82 = vmatprep.subr.mxu0 0.0
    %83 = vmatpush1.msra.mxu0 0.0
    %84 = vmatprep.subr.mxu0 0.0
    %85 = vmatpush1.msra.mxu0 0.0
    %86 = vmatprep.subr.mxu0 0.0
    %87 = vmatpush1.msra.mxu0 0.0
    %88 = vmatprep.subr.mxu0 0.0
    %89 = vmatpush1.msra.mxu0 0.0
    %90 = vmatprep.subr.mxu0 0.0
    %91 = vmatpush1.msra.mxu0 0.0
    %92 = vmatprep.subr.mxu0 0.0
    %93 = vmatpush1.msra.mxu0 0.0
    %94 = vmatprep.subr.mxu0 0.0
    %95 = vmatpush1.msra.mxu0 0.0
    %96 = vmatprep.subr.mxu0 %v78
    %97 = vmatpush1.msra.mxu0 %v75
    %98 = vmatprep.subr.mxu0 %v54
    %99 = vmatpush1.msra.mxu0 %v53
    %100 = vmatprep.subr.mxu0 %v52
    %101 = vmatpush1.msra.mxu0 %v51
    %102 = vmatprep.subr.mxu0 %v50
    %103 = vmatpush1.msra.mxu0 %v49
    %104 = vmatprep.subr.mxu0 %v48
    %105 = vmatpush1.msra.mxu0 %v47
    %106 = vmatprep.subr.mxu0 %v46
    %107 = vmatpush1.msra.mxu0 %v45
    %108 = vmatprep.subr.mxu0 %v44
    %109 = vmatpush1.msra.mxu0 %v43
    %110 = vmatprep.subr.mxu0 %v42
    %111 = vmatpush1.msra.mxu0 %v41
    %112 = vmatprep.subr.mxu0 0.0
    %113 = vmatpush2.msra.mxu0 0.0
    %114 = vmatprep.subr.mxu0 0.0
    %115 = vmatpush2.msra.mxu0 0.0
    %116 = vmatprep.subr.mxu0 0.0
    %117 = vmatpush2.msra.mxu0 0.0
    %118 = vmatprep.subr.mxu0 0.0
    %119 = vmatpush2.msra.mxu0 0.0
    %120 = vmatprep.subr.mxu0 0.0
    %121 = vmatpush2.msra.mxu0 0.0
    %122 = vmatprep.subr.mxu0 0.0
    %123 = vmatpush2.msra.mxu0 0.0
    %124 = vmatprep.subr.mxu0 0.0
    %125 = vmatpush2.msra.mxu0 0.0
    %126 = vmatprep.subr.mxu0 0.0
    %127 = vmatpush2.msra.mxu0 0.0
    %128 = vmatprep.subr.mxu0 0.0
    %129 = vmatpush2.msra.mxu0 0.0
    %130 = vmatprep.subr.mxu0 0.0
    %131 = vmatpush2.msra.mxu0 0.0
    %132 = vmatprep.subr.mxu0 0.0
    %133 = vmatpush2.msra.mxu0 0.0
    %134 = vmatprep.subr.mxu0 0.0
    %135 = vmatpush2.msra.mxu0 0.0
    %136 = vmatprep.subr.mxu0 0.0
    %137 = vmatpush2.msra.mxu0 0.0
    %138 = vmatprep.subr.mxu0 0.0
    %139 = vmatpush2.msra.mxu0 0.0
    %140 = vmatprep.subr.mxu0 0.0
    %141 = vmatpush2.msra.mxu0 0.0
    %142 = vmatprep.subr.mxu0 0.0
    %143 = vmatpush2.msra.mxu0 0.0
    %144 = vmatprep.mubr.f32.mxu0 0.0
    %145 = vmatmul.mubr.f32.gmra.mxu0 %v71
    %v146 = vpop.f32.mrf.mxu0
    %v147 = vadd.f32 %v62, %v146
    %v148 = vpop.f32.mrf.mxu0
    %v149 = vadd.f32 %v66, %v148
    %150 = vdwg.mxu0
    %v153 = vcombine.low %v147, %v149
    %v155 = vunpack.c.l.s4 1983009808
    %v156 = vunpack.c.0.s8 %v155
    %v157 = vlaneseq
    %v158 = vshrl.u32 %v157, 7
    %v159 = vsub.s32 %v156, %v158
    %v160 = vrot.slane %v153, %v159
    %162 = vst [vmem:[%s3] sm:$0xf] %v160
    // Predicated region
    $region22: #{patch_embeddings_forward.1} parent=1 // pred_check
      _
    $region23: #{patch_embeddings_forward.1} parent=1 // pred_check_branch
      %164 = sbr.rel (0) target = $region25
    $region24: #{patch_embeddings_forward.1} parent=1 // pred_region
      _
    $region25: #{patch_embeddings_forward.1} parent=1 // pred_fallthru
      _
    // Predicated region
    $region26: #{patch_embeddings_forward.1} parent=1 // pred_check
      _
    $region27: #{patch_embeddings_forward.1} parent=1 // pred_check_branch
      %166 = sbr.rel (0) target = $region29
    $region28: #{patch_embeddings_forward.1} parent=1 // pred_region
      _
    $region29: #{patch_embeddings_forward.1} parent=1 // pred_fallthru
      _
    %167 = vsyncpa [#allocation3], 1
    %168 = vsyncpa [#allocation5], 1

</llo_original>
